<compile_context>
chip_gen: v5e
topology: v5e:2x2
jax: 0.10.0
libtpu: 0.0.40
codegen_flags: <defaults>
</compile_context>

<pallas_src>
import functools

import jax
import jax.numpy as jnp
import numpy as np
from jax.experimental import pallas as pl
from jax.experimental.pallas import tpu as pltpu


# ============================================================================
# Sinusoidal positional-encoding table (PositionEncoder1D.generate_encoder)
# ============================================================================
def generate_encoder(in_channels: int, max_len: int) -> jax.Array:
    pos = jnp.arange(max_len, dtype=jnp.float32)[:, None]
    i = jnp.arange(in_channels, dtype=jnp.float32)[None, :]
    angle_rates = 1.0 / jnp.power(10000.0, 2.0 * jnp.floor(i / 2.0) / in_channels)
    pe = pos * angle_rates
    pe = pe.at[:, 0::2].set(jnp.sin(pe[:, 0::2]))
    pe = pe.at[:, 1::2].set(jnp.cos(pe[:, 1::2]))
    return pe


# ============================================================================
# Tiling helpers
# ============================================================================
def _tile(dim: int, target: int, unit: int) -> int:
    """Largest multiple of `unit` <= target dividing dim, else the full dim."""
    if dim <= target:
        return dim
    t = (target // unit) * unit
    while t >= unit:
        if dim % t == 0:
            return t
        t -= unit
    return dim


_TILE_TARGETS = None


def _linear_tile_targets():
    """Bigger weight tiles where VMEM allows (v5e/v6e 128 MiB); conservative otherwise (v7x)."""
    global _TILE_TARGETS
    if _TILE_TARGETS is None:
        targets = (256, 512, 512)
        try:
            if pltpu.get_tpu_info().vmem_capacity_bytes >= (96 << 20):
                targets = (256, 1024, 1024)
        except Exception:
            pass
        _TILE_TARGETS = targets
    return _TILE_TARGETS


# ============================================================================
# Kernel 1: fused matmul + bias (+ optional ReLU)   y = act(x @ W + b)
#           Native-dtype MXU operands; f32 accumulation via preferred_element_type.
# ============================================================================
def _linear_kernel(x_ref, w_ref, b_ref, o_ref, acc_ref, *, relu):
    @pl.when(pl.program_id(2) == 0)
    def _():
        acc_ref[...] = jnp.zeros_like(acc_ref)

    acc_ref[...] += jnp.dot(x_ref[...], w_ref[...], preferred_element_type=jnp.float32)

    @pl.when(pl.program_id(2) == pl.num_programs(2) - 1)
    def _():
        r = acc_ref[...] + b_ref[...]
        if relu:
            r = jnp.maximum(r, 0.0)
        o_ref[...] = r.astype(o_ref.dtype)


def linear(x, w, b, *, relu=False):
    M, K = x.shape
    _, N = w.shape
    tm_t, tn_t, tk_t = _linear_tile_targets()
    tm = _tile(M, tm_t, 8)
    tn = _tile(N, tn_t, 128)
    tk = _tile(K, tk_t, 128)
    b2 = b.reshape(1, N).astype(jnp.float32)
    return pl.pallas_call(
        functools.partial(_linear_kernel, relu=relu),
        out_shape=jax.ShapeDtypeStruct((M, N), x.dtype),
        grid_spec=pltpu.PrefetchScalarGridSpec(
            num_scalar_prefetch=0,
            grid=(M // tm, N // tn, K // tk),
            in_specs=[
                pl.BlockSpec((tm, tk), lambda i, j, k: (i, k)),
                pl.BlockSpec((tk, tn), lambda i, j, k: (k, j)),
                pl.BlockSpec((1, tn), lambda i, j, k: (0, j)),
            ],
            out_specs=pl.BlockSpec((tm, tn), lambda i, j, k: (i, j)),
            scratch_shapes=[pltpu.VMEM((tm, tn), jnp.float32)],
        ),
        compiler_params=pltpu.CompilerParams(
            dimension_semantics=("parallel", "parallel", "arbitrary")),
    )(x, w, b2)


# ============================================================================
# Kernel 2: fused matmul + bias (+ optional ReLU) + residual add + LayerNorm
#           y = LN(act(x @ W + b) + residual) * gamma + beta
#           Requires the full output width N resident (tn == N) for the LN row reduce.
# ============================================================================
def _linear_ln_kernel(x_ref, w_ref, b_ref, res_ref, g_ref, bt_ref, o_ref, acc_ref,
                      *, relu, eps):
    @pl.when(pl.program_id(1) == 0)
    def _():
        acc_ref[...] = jnp.zeros_like(acc_ref)

    acc_ref[...] += jnp.dot(x_ref[...], w_ref[...], preferred_element_type=jnp.float32)

    @pl.when(pl.program_id(1) == pl.num_programs(1) - 1)
    def _():
        r = acc_ref[...] + b_ref[...]
        if relu:
            r = jnp.maximum(r, 0.0)
        r = r + res_ref[...].astype(jnp.float32)
        mu = jnp.mean(r, axis=-1, keepdims=True)
        rc = r - mu
        var = jnp.mean(rc * rc, axis=-1, keepdims=True)
        y = rc * jax.lax.rsqrt(var + eps)
        o_ref[...] = (y * g_ref[...] + bt_ref[...]).astype(o_ref.dtype)


def linear_ln(x, w, b, residual, gamma, beta, *, relu=False, eps=1e-5):
    M, K = x.shape
    _, N = w.shape
    tm_t, _, tk_t = _linear_tile_targets()
    tm = _tile(M, tm_t, 8)
    tk = _tile(K, tk_t, 128)
    b2 = b.reshape(1, N).astype(jnp.float32)
    g2 = gamma.reshape(1, N).astype(jnp.float32)
    bt2 = beta.reshape(1, N).astype(jnp.float32)
    return pl.pallas_call(
        functools.partial(_linear_ln_kernel, relu=relu, eps=eps),
        out_shape=jax.ShapeDtypeStruct((M, N), x.dtype),
        grid_spec=pltpu.PrefetchScalarGridSpec(
            num_scalar_prefetch=0,
            grid=(M // tm, K // tk),
            in_specs=[
                pl.BlockSpec((tm, tk), lambda i, k: (i, k)),
                pl.BlockSpec((tk, N), lambda i, k: (k, 0)),
                pl.BlockSpec((1, N), lambda i, k: (0, 0)),
                pl.BlockSpec((tm, N), lambda i, k: (i, 0)),
                pl.BlockSpec((1, N), lambda i, k: (0, 0)),
                pl.BlockSpec((1, N), lambda i, k: (0, 0)),
            ],
            out_specs=pl.BlockSpec((tm, N), lambda i, k: (i, 0)),
            scratch_shapes=[pltpu.VMEM((tm, N), jnp.float32)],
        ),
        compiler_params=pltpu.CompilerParams(
            dimension_semantics=("parallel", "arbitrary")),
    )(x, w, b2, residual, g2, bt2)


# ============================================================================
# Kernel 3: embedding scale + positional-encoding add on (B, T, C)
#           out = x * sqrt(C) + pe[:T]    (PE indexed by the T tile only; no jnp.tile copy)
# ============================================================================
def _scale_add_pe_kernel(x_ref, pe_ref, o_ref, *, scale):
    o_ref[...] = (x_ref[...] * scale + pe_ref[...]).astype(o_ref.dtype)


def embed_scale_add_pe(x, pe_T, scale):
    B, T, C = x.shape
    tt = _tile(T, 512, 8)
    return pl.pallas_call(
        functools.partial(_scale_add_pe_kernel, scale=scale),
        out_shape=jax.ShapeDtypeStruct((B, T, C), x.dtype),
        grid_spec=pltpu.PrefetchScalarGridSpec(
            num_scalar_prefetch=0,
            grid=(B, T // tt),
            in_specs=[
                pl.BlockSpec((1, tt, C), lambda b, t: (b, t, 0)),
                pl.BlockSpec((tt, C), lambda b, t: (t, 0)),
            ],
            out_specs=pl.BlockSpec((1, tt, C), lambda b, t: (b, t, 0)),
        ),
        compiler_params=pltpu.CompilerParams(
            dimension_semantics=("parallel", "parallel")),
    )(x, pe_T.astype(x.dtype))


# ============================================================================
# Kernel 4: scaled-dot-product attention, all heads per batch element
#           out[:, h*Dh:(h+1)*Dh] = softmax(q_h k_h^T * inv_temp + bias) @ v_h
#           Head split is done on the channel dim inside the kernel (no HBM transposes);
#           output is a lane-dense (Lq, C) slab; bias is optional.
# ============================================================================
def _sdpa_kernel(q_ref, k_ref, v_ref, *rest, H, Dh, inv_temp, has_bias):
    if has_bias:
        bias_ref, o_ref = rest
        bias = bias_ref[0]
    else:
        (o_ref,) = rest
        bias = None
    q = q_ref[0]          # (Lq, C) native dtype
    k = k_ref[0]          # (Lk, C)
    v = v_ref[0]          # (Lk, C)
    outs = []
    for h in range(H):
        qh = q[:, h * Dh:(h + 1) * Dh]
        kh = k[:, h * Dh:(h + 1) * Dh]
        vh = v[:, h * Dh:(h + 1) * Dh]
        s = jax.lax.dot_general(qh, kh, (((1,), (1,)), ((), ())),
                                preferred_element_type=jnp.float32) * inv_temp
        if bias is not None:
            s = s + bias
        s = s - jnp.max(s, axis=-1, keepdims=True)
        p = jnp.exp(s)
        denom = jnp.sum(p, axis=-1, keepdims=True)
        p = p * pl.reciprocal(denom, approx=True)
        outs.append(jnp.dot(p.astype(vh.dtype), vh, preferred_element_type=jnp.float32))
    o_ref[0, :, :] = jnp.concatenate(outs, axis=-1).astype(o_ref.dtype)


def sdpa(q, k, v, bias, inv_temp, head_num):
    # q: (B, Lq, C); k/v: (B, Lk, C); bias: (B, Lq, Lk) f32 or None
    B, Lq, C = q.shape
    Lk = k.shape[1]
    Dh = C // head_num
    has_bias = bias is not None
    in_specs = [
        pl.BlockSpec((1, Lq, C), lambda b: (b, 0, 0)),
        pl.BlockSpec((1, Lk, C), lambda b: (b, 0, 0)),
        pl.BlockSpec((1, Lk, C), lambda b: (b, 0, 0)),
    ]
    args = [q, k, v]
    if has_bias:
        in_specs.append(pl.BlockSpec((1, Lq, Lk), lambda b: (b, 0, 0)))
        args.append(bias)
    return pl.pallas_call(
        functools.partial(_sdpa_kernel, H=head_num, Dh=Dh,
                          inv_temp=inv_temp, has_bias=has_bias),
        out_shape=jax.ShapeDtypeStruct((B, Lq, C), q.dtype),
        grid_spec=pltpu.PrefetchScalarGridSpec(
            num_scalar_prefetch=0,
            grid=(B,),
            in_specs=in_specs,
            out_specs=pl.BlockSpec((1, Lq, C), lambda b: (b, 0, 0)),
        ),
        compiler_params=pltpu.CompilerParams(dimension_semantics=("parallel",)),
    )(*args)


# ============================================================================
# Kernel 5: decode-step positional encoding (pos_encoder(x, point=t))
#           `point` is a scalar-prefetched SMEM value used in the PE index_map, so only
#           the single (1, C) PE row is DMA'd (not the whole table); one compile for all steps.
# ============================================================================
def _add_pe_point_kernel(point_ref, x_ref, pe_ref, o_ref):
    del point_ref  # consumed by the index_map
    o_ref[...] = x_ref[...] + pe_ref[0]


def add_pe_at_point(x, pe_table, point):
    # x: (B, 1, C); point: int32 scalar (traced); pe_table: (max_len, C)
    B, _, C = x.shape
    max_len = pe_table.shape[0]
    xf = x.reshape(B, C)
    pe3 = pe_table.astype(x.dtype).reshape(max_len, 1, C)
    point_arr = jnp.asarray(point, jnp.int32).reshape(1)
    out = pl.pallas_call(
        _add_pe_point_kernel,
        out_shape=jax.ShapeDtypeStruct((B, C), x.dtype),
        grid_spec=pltpu.PrefetchScalarGridSpec(
            num_scalar_prefetch=1,
            grid=(1,),
            in_specs=[
                pl.BlockSpec((B, C), lambda i, pt: (0, 0)),
                pl.BlockSpec((1, 1, C), lambda i, pt: (pt[0], 0, 0)),
            ],
            out_specs=pl.BlockSpec((B, C), lambda i, pt: (0, 0)),
        ),
    )(point_arr, xf, pe3)
    return out.reshape(B, 1, C)


# ============================================================================
# Mask helper: pad_mask | order_mask as an additive f32 bias
# ============================================================================
def make_self_attn_bias(text, pad_id):
    B, T = text.shape
    pad = (text == pad_id)
    pad = pad.at[:, 0].set(False)
    order = jnp.triu(jnp.ones((T, T), jnp.int32), 1).astype(bool)
    mask = pad[:, None, :] | order[None, :, :]
    return jnp.where(mask, jnp.float32(-1e30), jnp.float32(0.0))


# ============================================================================
# Full decoder forward (teacher forcing) built from the Pallas kernels
# ============================================================================
def satrn_decoder_forward(params, src, text, cfg):
    B, T = text.shape
    S = src.shape[1]
    C = cfg['hidden_dim']
    H = cfg['head_num']
    scale = float(np.sqrt(C))
    inv_temp = 1.0 / scale

    # --- text_embedding + PositionEncoder1D(point=-1); dropout = identity ---
    emb = jnp.take(params['embedding'], text, axis=0)              # (B, T, C) gather glue
    x = embed_scale_add_pe(emb, params['pe'][:T, :], scale)        # (B, T, C)

    # --- tgt_mask = pad_mask | order_mask (self); cross attention has no mask ---
    self_bias = make_self_attn_bias(text, cfg['pad_id'])

    for lp in params['layers']:
        # ----- self attention (fused QKV projection) -----
        p = lp['self']
        wqkv = jnp.concatenate([p['wq'], p['wk'], p['wv']], axis=1)    # (C, 3C)
        bqkv = jnp.concatenate([p['bq'], p['bk'], p['bv']], axis=0)
        qkv = linear(x.reshape(B * T, C), wqkv, bqkv)                  # (B*T, 3C)
        q = qkv[:, :C].reshape(B, T, C)
        k = qkv[:, C:2 * C].reshape(B, T, C)
        v = qkv[:, 2 * C:].reshape(B, T, C)
        att = sdpa(q, k, v, self_bias, inv_temp, H)                    # (B, T, C)
        x = linear_ln(att.reshape(B * T, C), p['wo'], p['bo'],
                      x.reshape(B * T, C), lp['ln1_g'], lp['ln1_b']).reshape(B, T, C)

        # ----- cross attention (fused KV projection over src) -----
        p = lp['cross']
        q = linear(x.reshape(B * T, C), p['wq'], p['bq']).reshape(B, T, C)
        wkv = jnp.concatenate([p['wk'], p['wv']], axis=1)              # (src_dim, 2C)
        bkv = jnp.concatenate([p['bk'], p['bv']], axis=0)
        kv = linear(src.reshape(B * S, src.shape[2]), wkv, bkv)        # (B*S, 2C)
        k = kv[:, :C].reshape(B, S, C)
        v = kv[:, C:].reshape(B, S, C)
        att = sdpa(q, k, v, None, inv_temp, H)                         # no zero-bias tensor
        x = linear_ln(att.reshape(B * T, C), p['wo'], p['bo'],
                      x.reshape(B * T, C), lp['ln2_g'], lp['ln2_b']).reshape(B, T, C)

        # ----- feedforward: relu(linear0) -> relu(linear1), then residual + LN -----
        # (PyTorch Feedforward applies ReLU after BOTH linears.)
        h = linear(x.reshape(B * T, C), lp['ff_w0'], lp['ff_b0'], relu=True)
        x = linear_ln(h, lp['ff_w1'], lp['ff_b1'],
                      x.reshape(B * T, C), lp['ln3_g'], lp['ln3_b'],
                      relu=True).reshape(B, T, C)

    logits = linear(x.reshape(B * T, C), params['gen_w'], params['gen_b'])
    return logits.reshape(B, T, cfg['num_classes'])


# ============================================================================
# Parameters (deterministic) + pure-JAX reference for correctness
# ============================================================================
def init_params(key, cfg):
    C = cfg['hidden_dim']
    Fd = cfg['filter_dim']
    V = cfg['num_classes'] + 1
    SD = cfg['src_dim']
    keys = iter(jax.random.split(key, 256))

    def dense(in_d, out_d):
        w = jax.random.normal(next(keys), (in_d, out_d), jnp.float32) / np.sqrt(in_d)
        b = 0.01 * jax.random.normal(next(keys), (out_d,), jnp.float32)
        return w, b

    def mha(k_ch):
        wq, bq = dense(C, C)
        wk, bk = dense(k_ch, C)
        wv, bv = dense(k_ch, C)
        wo, bo = dense(C, C)
        return dict(wq=wq, bq=bq, wk=wk, bk=bk, wv=wv, bv=bv, wo=wo, bo=bo)

    def ln():
        g = 1.0 + 0.1 * jax.random.normal(next(keys), (C,), jnp.float32)
        b = 0.1 * jax.random.normal(next(keys), (C,), jnp.float32)
        return g, b

    layers = []
    for _ in range(cfg['layer_num']):
        g1, b1 = ln(); g2, b2 = ln(); g3, b3 = ln()
        w0, bb0 = dense(C, Fd)
        w1, bb1 = dense(Fd, C)
        layers.append(dict(self=mha(C), cross=mha(SD),
                           ln1_g=g1, ln1_b=b1, ln2_g=g2, ln2_b=b2,
                           ln3_g=g3, ln3_b=b3,
                           ff_w0=w0, ff_b0=bb0, ff_w1=w1, ff_b1=bb1))
    gw, gb = dense(C, cfg['num_classes'])
    return dict(embedding=0.1 * jax.random.normal(next(keys), (V, C), jnp.float32),
                pe=generate_encoder(C, cfg['max_len']),
                layers=layers, gen_w=gw, gen_b=gb)


def ref_forward(params, src, text, cfg):
    C = cfg['hidden_dim']
    H = cfg['head_num']
    Dh = C // H
    B, T = text.shape
    scale = float(np.sqrt(C))
    inv_temp = 1.0 / scale

    x = params['embedding'][text] * scale + params['pe'][None, :T, :]
    bias = make_self_attn_bias(text, cfg['pad_id'])

    def ln(v, g, b):
        mu = jnp.mean(v, axis=-1, keepdims=True)
        var = jnp.mean((v - mu) ** 2, axis=-1, keepdims=True)
        return (v - mu) * jax.lax.rsqrt(var + 1e-5) * g + b

    def mha(q, kv, bias_, p):
        Bq, Lq, _ = q.shape
        Lk = kv.shape[1]
        qh = (q @ p['wq'] + p['bq']).reshape(Bq, Lq, H, Dh).transpose(0, 2, 1, 3)
        kh = (kv @ p['wk'] + p['bk']).reshape(Bq, Lk, H, Dh).transpose(0, 2, 1, 3)
        vh = (kv @ p['wv'] + p['bv']).reshape(Bq, Lk, H, Dh).transpose(0, 2, 1, 3)
        s = jnp.einsum('bhqd,bhkd->bhqk', qh, kh) * inv_temp
        if bias_ is not None:
            s = s + bias_[:, None, :, :]
        a = jax.nn.softmax(s, axis=-1)
        o = jnp.einsum('bhqk,bhkd->bhqd', a, vh)
        o = o.transpose(0, 2, 1, 3).reshape(Bq, Lq, H * Dh)
        return o @ p['wo'] + p['bo']

    for lp in params['layers']:
        a = mha(x, x, bias, lp['self'])
        x = ln(a + x, lp['ln1_g'], lp['ln1_b'])
        a = mha(x, src, None, lp['cross'])
        x = ln(a + x, lp['ln2_g'], lp['ln2_b'])
        h = jnp.maximum(x @ lp['ff_w0'] + lp['ff_b0'], 0.0)
        h = jnp.maximum(h @ lp['ff_w1'] + lp['ff_b1'], 0.0)
        x = ln(h + x, lp['ln3_g'], lp['ln3_b'])

    return x @ params['gen_w'] + params['gen_b']


# ============================================================================
# Demo / correctness check
# ============================================================================
if __name__ == "__main__":
    cfg = dict(num_classes=10, src_dim=32, hidden_dim=32, filter_dim=64,
               head_num=4, pad_id=0, st_id=1, layer_num=2, max_len=500)
    B, T, S = 2, 8, 16

    key = jax.random.PRNGKey(0)
    k_par, k_src, k_txt, k_x = jax.random.split(key, 4)
    params = init_params(k_par, cfg)
    src = jax.random.normal(k_src, (B, S, cfg['src_dim']), jnp.float32)
    text = jax.random.randint(k_txt, (B, T), 0, cfg['num_classes'] + 1)

    # --- teacher-forcing decoder forward (Pallas) vs pure-JAX reference ---
    out = satrn_decoder_forward(params, src, text, cfg)
    out = jax.block_until_ready(out)
    assert out.shape == (B, T, cfg['num_classes'])
    ref = ref_forward(params, src, text, cfg)
    np.testing.assert_allclose(np.asarray(out), np.asarray(ref),
                               rtol=1e-2, atol=1e-2)

    # --- decode-step positional encoding: pos_encoder(x, point=t) ---
    x_step = jax.random.normal(k_x, (B, 1, cfg['hidden_dim']), jnp.float32)
    t_step = jnp.int32(3)                       # runtime scalar: no retrace per step
    out_p = jax.block_until_ready(add_pe_at_point(x_step, params['pe'], t_step))
    ref_p = x_step + params['pe'][3][None, None, :]
    np.testing.assert_allclose(np.asarray(out_p), np.asarray(ref_p),
                               rtol=1e-6, atol=1e-6)

    print("KERNEL_OK")
</pallas_src>

<mosaic_0001>
module attributes {stable_mosaic.version = 11 : i64} {
  func.func @_scale_add_pe_kernel(%arg0: i32, %arg1: i32, %arg2: memref<1x8x32xf32, #tpu.memory_space<vmem>>, %arg3: memref<8x32xf32, #tpu.memory_space<vmem>>, %arg4: memref<1x8x32xf32, #tpu.memory_space<vmem>>) attributes {dimension_semantics = [#tpu.dimension_semantics<parallel>, #tpu.dimension_semantics<parallel>], iteration_bounds = array<i64: 2, 1>, scalar_prefetch = 0 : i64, scratch_operands = 0 : i64, tpu.core_type = #tpu.core_type<tc>, window_params = [{transform_indices = @transform_0, window_bounds = array<i64: 1, 8, 32>}, {transform_indices = @transform_1, window_bounds = array<i64: 8, 32>}, {transform_indices = @transform_2, window_bounds = array<i64: 1, 8, 32>}]} {
    %c0 = arith.constant 0 : index
    %c0_0 = arith.constant 0 : index
    %c0_1 = arith.constant 0 : index
    %0 = vector.load %arg2[%c0, %c0_0, %c0_1] : memref<1x8x32xf32, #tpu.memory_space<vmem>>, vector<1x8x32xf32>
    %cst = arith.constant 5.65685415 : f32
    %1 = vector.broadcast %cst : f32 to vector<1x8x32xf32>
    %2 = arith.mulf %0, %1 : vector<1x8x32xf32>
    %c0_2 = arith.constant 0 : index
    %c0_3 = arith.constant 0 : index
    %3 = vector.load %arg3[%c0_2, %c0_3] : memref<8x32xf32, #tpu.memory_space<vmem>>, vector<8x32xf32>
    %4 = vector.shape_cast %3 : vector<8x32xf32> to vector<1x8x32xf32>
    %5 = arith.addf %2, %4 : vector<1x8x32xf32>
    %c0_4 = arith.constant 0 : index
    %c0_5 = arith.constant 0 : index
    %c0_6 = arith.constant 0 : index
    %6 = vector.load %arg4[%c0_4, %c0_5, %c0_6] : memref<1x8x32xf32, #tpu.memory_space<vmem>>, vector<1x8x32xf32>
    tpu.vector_store %arg4[%c0_4, %c0_5, %c0_6], %5 {strides = array<i32>} : memref<1x8x32xf32, #tpu.memory_space<vmem>>, vector<1x8x32xf32>,
    return
  }
  func.func @transform_0(%arg0: i32, %arg1: i32) -> (i32, i32, i32) {
    %c0_i32 = arith.constant 0 : i32
    %c0_i32_0 = arith.constant 0 : i32
    return %arg0, %arg1, %c0_i32 : i32, i32, i32
  }
  func.func @transform_1(%arg0: i32, %arg1: i32) -> (i32, i32) {
    %c0_i32 = arith.constant 0 : i32
    %c0_i32_0 = arith.constant 0 : i32
    return %arg1, %c0_i32 : i32, i32
  }
  func.func @transform_2(%arg0: i32, %arg1: i32) -> (i32, i32, i32) {
    %c0_i32 = arith.constant 0 : i32
    %c0_i32_0 = arith.constant 0 : i32
    return %arg0, %arg1, %c0_i32 : i32, i32, i32
  }
}

</mosaic_0001>

<llo_original>
// kernel: tpu_custom_call.1
$region0: #{tpu_custom_call.1}
  #allocation0 [shape = 'u32[]', space=smem, size = 0x4, offset = 0x4, fixed_abs, tag = 'smem constant byte address 0x4 - core index']
  #allocation1 [shape = 'u32[72,128]{1,0:T(1,128)}', space=vmem, size = 0x9000, scoped, tag = 'internal scratch']
  %s0 = inlined_call_operand.hbm [shape: f32[2,8,32], index: 0, kind: input, shape index: {}]
  %s1 = inlined_call_operand.hbm [shape: f32[8,32], index: 1, kind: input, shape index: {}]
  %s2 = inlined_call_operand.hbm [shape: f32[2,8,32], index: 2, kind: output, shape index: {}]
  %s3 = sld [smem:[#allocation0]]
  $region49: #{tpu_custom_call.1} parent=0
    _
  %s5 = ssub.s32 1, %s3
  %s6 = scalar_select 0, %s5, %s3
  $region1: #{tpu_custom_call.1} parent=0
    #allocation2 [shape = 'u8[8192]{0}', space=vmem, size = 0x2000, scoped, tag = 'input window, operand 0']
    #allocation3 [shape = 's32[2]{0}', space=sflag, size = 0x8, scoped, tag = 'scoped memory for tpu_custom_call.1']
    #allocation4 [shape = 's32[2]{0}', space=sflag, size = 0x8, scoped, tag = 'scoped memory for tpu_custom_call.1']
    #allocation5 [shape = 'u8[4096]{0}', space=vmem, size = 0x1000, scoped, tag = 'input window, operand 1, single buffered']
    #allocation6 [shape = 's32[1]{0}', space=sflag, size = 0x4, scoped, tag = 'scoped memory for tpu_custom_call.1']
    #allocation7 [shape = 'u8[8192]{0}', space=vmem, size = 0x2000, scoped, tag = 'output window, operand 0']
    %7 = vsyncpa [#allocation3], 0
    %s8 = scalar_lea.sflag [#allocation3], 1
    %9 = vsyncpa %s8, 0
    %10 = vsyncpa [#allocation6], 0
    %11 = vsyncpa [#allocation4], 0
    %s12 = scalar_lea.sflag [#allocation4], 1
    %13 = vsyncpa %s12, 0
    loop: start=0, step=1, limit=4
    $region2: #{tpu_custom_call.1} parent=1 // loop_pre_header
      _
    $region3: #{tpu_custom_call.1} parent=1 // loop_header
      %s15 = sphi 0, %s19
      %p16 = scmp.ge.s32.totalorder %s15, 4
      %s22 = sphi 0, %s34
      %s23 = sphi 0, %s30
      %s24 = sphi 0, %s22
      %s25 = sphi 0, %s23
      %s26 = sphi 0, %s24
      %s27 = sphi 0, %s25
      %s39 = sphi 0, %s41
      %s42 = sphi 0, %s39
      %s43 = sphi 0, %s42
      %s59 = sphi 0, %s43
      %s65 = sphi 0, %s67
      %s68 = sphi 0, %s65
      %s69 = sphi 0, %s68
      %s85 = sphi 0, %s69
      %s93 = sphi 0, %s95
      %s96 = sphi 0, %s93
      %s97 = sphi 0, %s96
      %s113 = sphi 0, %s97
    $region4: #{tpu_custom_call.1} parent=1 // loop_header_branch
      %18 = sbr.rel (%p16) target = $region8
    $region5: #{tpu_custom_call.1} parent=1 // loop_body
      %s20 = ssub.s32 %s15, 1
      %s21 = ssub.s32 %s15, 2
      %s28 = sadd.s32 1, %s23
      %p29 = scmp.ge.s32.totalorder %s28, 1
      %s30 = scalar_select %p29, 0, %s28
      %s31 = sadd.s32 1, %s22
      %s32 = scalar_select %p29, %s31, %s22
      %p33 = scmp.ge.s32.totalorder %s32, 2
      %s34 = scalar_select %p33, 0, %s32
      %s35 = ssub.s32 %s22, %s34
      %s36 = ssub.s32 %s23, %s30
      %s37 = sor.u32 %s35, %s36
      %p38 = scmp.eq.s32.totalorder %s37, 0
      %s40 = sadd.s32 %s39, 1
      %s41 = scalar_select %p38, %s39, %s40
      %p44 = pneg %p38
      %p45 = scmp.eq.s32.totalorder %s15, 1
      %p46 = por %p44, %p45
      %p47 = scmp.ne.s32.totalorder %s39, %s42
      %p48 = scmp.eq.s32.totalorder %s15, 0
      %p49 = por %p47, %p48
      %p50 = scmp.ne.s32.totalorder %s39, %s42
      %p51 = scmp.eq.s32.totalorder %s20, 1
      %p52 = por %p50, %p51
      %p53 = scmp.ne.s32.totalorder %s42, %s43
      %p54 = scmp.eq.s32.totalorder %s20, 0
      %p55 = por %p53, %p54
      %p56 = scmp.ne.s32.totalorder %s42, %s43
      %p57 = scmp.eq.s32.totalorder %s21, 1
      %p58 = por %p56, %p57
      %p60 = scmp.ne.s32.totalorder %s43, %s59
      %p61 = scmp.eq.s32.totalorder %s21, 0
      %p62 = por %p60, %p61
      %s63 = ssub.s32 %s23, %s30
      %p64 = scmp.eq.s32.totalorder %s63, 0
      %s66 = sadd.s32 %s65, 1
      %s67 = scalar_select %p64, %s65, %s66
      %p70 = pneg %p64
      %p71 = scmp.eq.s32.totalorder %s15, 1
      %p72 = por %p70, %p71
      %p73 = scmp.ne.s32.totalorder %s65, %s68
      %p74 = scmp.eq.s32.totalorder %s15, 0
      %p75 = por %p73, %p74
      %p76 = scmp.ne.s32.totalorder %s65, %s68
      %p77 = scmp.eq.s32.totalorder %s20, 1
      %p78 = por %p76, %p77
      %p79 = scmp.ne.s32.totalorder %s68, %s69
      %p80 = scmp.eq.s32.totalorder %s20, 0
      %p81 = por %p79, %p80
      %p82 = scmp.ne.s32.totalorder %s68, %s69
      %p83 = scmp.eq.s32.totalorder %s21, 1
      %p84 = por %p82, %p83
      %p86 = scmp.ne.s32.totalorder %s69, %s85
      %p87 = scmp.eq.s32.totalorder %s21, 0
      %p88 = por %p86, %p87
      %s89 = ssub.s32 %s22, %s34
      %s90 = ssub.s32 %s23, %s30
      %s91 = sor.u32 %s89, %s90
      %p92 = scmp.eq.s32.totalorder %s91, 0
      %s94 = sadd.s32 %s93, 1
      %s95 = scalar_select %p92, %s93, %s94
      %p98 = pneg %p92
      %p99 = scmp.eq.s32.totalorder %s15, 1
      %p100 = por %p98, %p99
      %p101 = scmp.ne.s32.totalorder %s93, %s96
      %p102 = scmp.eq.s32.totalorder %s15, 0
      %p103 = por %p101, %p102
      %p104 = scmp.ne.s32.totalorder %s93, %s96
      %p105 = scmp.eq.s32.totalorder %s20, 1
      %p106 = por %p104, %p105
      %p107 = scmp.ne.s32.totalorder %s96, %s97
      %p108 = scmp.eq.s32.totalorder %s20, 0
      %p109 = por %p107, %p108
      %p110 = scmp.ne.s32.totalorder %s96, %s97
      %p111 = scmp.eq.s32.totalorder %s21, 1
      %p112 = por %p110, %p111
      %p114 = scmp.ne.s32.totalorder %s97, %s113
      %p115 = scmp.eq.s32.totalorder %s21, 0
      %p116 = por %p114, %p115
      %p117 = scmp.le.s32.totalorder 1, %s15
      %p118 = scmp.lt.s32.totalorder %s15, 3
      %p119 = pnand %p117, %p118
      %p120 = pneg %p119
      // Predicated region
      $region9: #{tpu_custom_call.1} parent=5 // pred_check
        _
      $region10: #{tpu_custom_call.1} parent=5 // pred_check_branch
        %122 = sbr.rel (%p119) target = $region12
      $region11: #{tpu_custom_call.1} parent=5 // pred_region
        %s123 = ssub.s32 %s15, 1
        // Predicated region
        $region13: #{tpu_custom_call.1} parent=11 // pred_check
          %p124 = pneg %p81
        $region14: #{tpu_custom_call.1} parent=11 // pred_check_branch
          %126 = sbr.rel (%p124) target = $region16
        $region15: #{tpu_custom_call.1} parent=11 // pred_region
          %128 = vsyncadd [#allocation6], 0
          %s129 = smul.addr %s25, 8
          %s130 = scalar_lea.hbm %s1, %s129
          %s132 = sshll.u32 %s130, 4
          %s133 = int_to_ptr.hbm [resolvable:$true] %s132
          %s134 = sshll.u32 [#allocation5], 4
          %s135 = int_to_ptr.vmem [resolvable:$true] %s134
          %137 = dma.hbm_to_vmem [thread:$0]  %s133, 128, %s135, [#allocation6]
        $region16: #{tpu_custom_call.1} parent=11 // pred_fallthru
          _
      $region12: #{tpu_custom_call.1} parent=5 // pred_fallthru
        _
      %p138 = scmp.lt.s32.totalorder %s15, 2
      // Predicated region
      $region17: #{tpu_custom_call.1} parent=5 // pred_check
        %p139 = pneg %p138
      $region18: #{tpu_custom_call.1} parent=5 // pred_check_branch
        %141 = sbr.rel (%p139) target = $region20
      $region19: #{tpu_custom_call.1} parent=5 // pred_region
        // Predicated region
        $region21: #{tpu_custom_call.1} parent=19 // pred_check
          %p142 = pneg %p49
        $region22: #{tpu_custom_call.1} parent=19 // pred_check_branch
          %144 = sbr.rel (%p142) target = $region24
        $region23: #{tpu_custom_call.1} parent=19 // pred_region
          %s145 = sand.u32 %s39, 1
          %s146 = scalar_lea.sflag [#allocation3], %s145
          %s147 = sand.u32 %s39, 1
          %s148 = smul.addr %s147, 8
          %s149 = scalar_lea.vmem [#allocation2], %s148
          %151 = vsyncadd %s146, 0
          %s152 = sadd.s32 %s23, %s22
          %s153 = smul.addr %s152, 8
          %s154 = scalar_lea.hbm %s0, %s153
          %s156 = sshll.u32 %s154, 4
          %s157 = int_to_ptr.hbm [resolvable:$true] %s156
          %s158 = sshll.u32 %s149, 4
          %s159 = int_to_ptr.vmem [resolvable:$true] %s158
          %161 = dma.hbm_to_vmem [thread:$0]  %s157, 128, %s159, %s146
        $region24: #{tpu_custom_call.1} parent=19 // pred_fallthru
          _
      $region20: #{tpu_custom_call.1} parent=5 // pred_fallthru
        _
      %p162 = scmp.le.s32.totalorder 1, %s15
      %p163 = scmp.lt.s32.totalorder %s15, 3
      %p164 = pnand %p162, %p163
      %p165 = pneg %p164
      // Predicated region
      $region25: #{tpu_custom_call.1} parent=5 // pred_check
        _
      $region26: #{tpu_custom_call.1} parent=5 // pred_check_branch
        %167 = sbr.rel (%p164) target = $region28
      $region27: #{tpu_custom_call.1} parent=5 // pred_region
        %s168 = ssub.s32 %s15, 1
        %s169 = sand.u32 %s42, 1
        %s170 = scalar_lea.sflag [#allocation3], %s169
        %s171 = sand.u32 %s42, 1
        %s172 = smul.addr %s171, 8
        %s173 = scalar_lea.vmem [#allocation2], %s172
        // Predicated region
        $region29: #{tpu_custom_call.1} parent=27 // pred_check
          %p174 = pneg %p55
        $region30: #{tpu_custom_call.1} parent=27 // pred_check_branch
          %176 = sbr.rel (%p174) target = $region32
        $region31: #{tpu_custom_call.1} parent=27 // pred_region
          %178 = dma.done %s170, 128
        $region32: #{tpu_custom_call.1} parent=27 // pred_fallthru
          _
        // Predicated region
        $region33: #{tpu_custom_call.1} parent=27 // pred_check
          %p179 = pneg %p81
        $region34: #{tpu_custom_call.1} parent=27 // pred_check_branch
          %181 = sbr.rel (%p179) target = $region36
        $region35: #{tpu_custom_call.1} parent=27 // pred_region
          %183 = dma.done [#allocation6], 128
        $region36: #{tpu_custom_call.1} parent=27 // pred_fallthru
          _
        %s184 = sand.u32 %s42, 1
        %s185 = scalar_lea.sflag [#allocation3], %s184
        %s186 = sand.u32 %s42, 1
        %s187 = smul.addr %s186, 8
        %s188 = scalar_lea.vmem [#allocation2], %s187
        %p189 = pneg %p55
        %p190 = pneg %p52
        %p191 = pneg %p81
        %p192 = pneg %p78
        %p193 = pneg %p109
        %p194 = pneg %p106
        %s195 = sand.u32 %s96, 1
        %s196 = scalar_lea.sflag [#allocation4], %s195
        %s197 = sand.u32 %s96, 1
        %s198 = smul.addr %s197, 8
        %s199 = scalar_lea.vmem [#allocation7], %s198
        %v200 = vld [vmem:[%s173] sm:$0xff]
        %v201 = vmul.f32 %v200, 5.656854
        %v202 = vld [vmem:[#allocation5] sm:$0xff]
        %v203 = vadd.f32 %v201, %v202
        %vm204 = vcmask 261120
        %205 = vst.msk [vmem:[%s199] sm:$0xff] %vm204, %v203
        %s206 = sand.u32 %s96, 1
        %s207 = scalar_lea.sflag [#allocation4], %s206
        %s208 = sand.u32 %s96, 1
        %s209 = smul.addr %s208, 8
        %s210 = scalar_lea.vmem [#allocation7], %s209
        // Predicated region
        $region37: #{tpu_custom_call.1} parent=27 // pred_check
          %p211 = pneg %p106
        $region38: #{tpu_custom_call.1} parent=27 // pred_check_branch
          %213 = sbr.rel (%p211) target = $region40
        $region39: #{tpu_custom_call.1} parent=27 // pred_region
          %215 = vsyncadd %s207, 0
          %s216 = sadd.s32 %s25, %s24
          %s217 = smul.addr %s216, 8
          %s218 = scalar_lea.hbm %s2, %s217
          %s220 = sshll.u32 %s210, 4
          %s221 = int_to_ptr.vmem [resolvable:$true] %s220
          %s222 = sshll.u32 %s218, 4
          %s223 = int_to_ptr.hbm [resolvable:$true] %s222
          %225 = dma.vmem_to_hbm [thread:$0]  %s221, 128, %s223, %s207
        $region40: #{tpu_custom_call.1} parent=27 // pred_fallthru
          _
      $region28: #{tpu_custom_call.1} parent=5 // pred_fallthru
        _
      %p226 = scmp.le.s32.totalorder 2, %s15
      // Predicated region
      $region41: #{tpu_custom_call.1} parent=5 // pred_check
        %p227 = pneg %p226
      $region42: #{tpu_custom_call.1} parent=5 // pred_check_branch
        %229 = sbr.rel (%p227) target = $region44
      $region43: #{tpu_custom_call.1} parent=5 // pred_region
        %s230 = ssub.s32 %s15, 2
        // Predicated region
        $region45: #{tpu_custom_call.1} parent=43 // pred_check
          %p231 = pneg %p112
        $region46: #{tpu_custom_call.1} parent=43 // pred_check_branch
          %233 = sbr.rel (%p231) target = $region48
        $region47: #{tpu_custom_call.1} parent=43 // pred_region
          %s234 = sand.u32 %s97, 1
          %s235 = scalar_lea.sflag [#allocation4], %s234
          %s236 = sand.u32 %s97, 1
          %s237 = smul.addr %s236, 8
          %s238 = scalar_lea.vmem [#allocation7], %s237
          %240 = dma.done %s235, 128
        $region48: #{tpu_custom_call.1} parent=43 // pred_fallthru
          _
      $region44: #{tpu_custom_call.1} parent=5 // pred_fallthru
        _
    $region6: #{tpu_custom_call.1} parent=1 // loop_footer
      %s19 = sadd.s32 1, %s15
    $region7: #{tpu_custom_call.1} parent=1 // loop_footer_branch
      %14 = sbr.rel target = $region3
    $region8: #{tpu_custom_call.1} parent=1 // loop_exit
      _
    %241 = vsyncpa [#allocation3], 1
    %s242 = scalar_lea.sflag [#allocation3], 1
    %243 = vsyncpa %s242, 1
    %244 = vsyncpa [#allocation6], 1
    %245 = vsyncpa [#allocation4], 1
    %s246 = scalar_lea.sflag [#allocation4], 1
    %247 = vsyncpa %s246, 1

</llo_original>
